<compile_context>
chip_gen: v7x
topology: tpu7x:2x2x1
jax: 0.10.0
libtpu: 0.0.40
codegen_flags: <defaults>
</compile_context>

<pallas_src>
import math

import jax
import jax.numpy as jnp
import numpy as np
from jax.experimental import pallas as pl
from jax.experimental.pallas import tpu as pltpu

PI = 0.5
SIGMA_1 = math.exp(-0.0)   # 1.0
SIGMA_2 = math.exp(-6.0)
LOG_SQRT_2PI = math.log(math.sqrt(2.0 * math.pi))

# Precomputed mixture-prior constants (shared single v*v per element).
_LOG_SIGMA_1 = math.log(SIGMA_1)
_LOG_SIGMA_2 = math.log(SIGMA_2)
_INV_2SIG1SQ = 1.0 / (2.0 * SIGMA_1 ** 2)
_INV_2SIG2SQ = 1.0 / (2.0 * SIGMA_2 ** 2)


def _bayes_linear_kernel(x_ref, wmu_ref, wrho_ref, weps_ref,
                         bmu_ref, brho_ref, beps_ref,
                         y_ref, scalars_ref):
    wmu = wmu_ref[...]        # (in_features, out_features)  -- pre-transposed in wrapper
    wrho = wrho_ref[...]
    weps = weps_ref[...]
    bmu = bmu_ref[...]        # (1, out_features)
    brho = brho_ref[...]
    beps = beps_ref[...]

    # --- reparameterized sampling: w = mu + softplus(rho) * eps ---
    w_sigma = jnp.log1p(jnp.exp(wrho))
    b_sigma = jnp.log1p(jnp.exp(brho))
    w = wmu + w_sigma * weps
    b = bmu + b_sigma * beps

    # --- variational posterior log prob.
    #     (sample - mu) == sigma * eps exactly, so (sample-mu)^2/(2 sigma^2) == 0.5*eps^2.
    #     This drops the per-element divide of the naive formula.
    def gauss_logprob_sum(sigma, eps):
        return jnp.sum(-LOG_SQRT_2PI - jnp.log(sigma) - 0.5 * eps * eps)

    log_var_post = (gauss_logprob_sum(w_sigma, weps)
                    + gauss_logprob_sum(b_sigma, beps))

    # --- scale-mixture-of-Gaussians prior, log-sum-exp form:
    #     log(PI*exp(lp1) + (1-PI)*exp(lp2)) = lp1 + log(PI + (1-PI)*exp(lp2-lp1))
    #     lp2 - lp1 <= log(sigma1/sigma2) = 6, so the single exp never overflows and
    #     the result never hits log(0) even when both densities underflow.
    def mixture_logprob_sum(val):
        v2 = val * val
        lp1 = -LOG_SQRT_2PI - _LOG_SIGMA_1 - v2 * _INV_2SIG1SQ
        lp2 = -LOG_SQRT_2PI - _LOG_SIGMA_2 - v2 * _INV_2SIG2SQ
        return jnp.sum(lp1 + jnp.log(PI + (1.0 - PI) * jnp.exp(lp2 - lp1)))

    log_prior = mixture_logprob_sum(w) + mixture_logprob_sum(b)

    # --- F.linear: y = x @ w + b  (w is already (in, out): no in-kernel transpose) ---
    x = x_ref[...]                                          # (batch, in_features)
    y = jnp.dot(x, w, preferred_element_type=jnp.float32)   # (batch, out_features)
    y_ref[...] = (y + b).astype(y_ref.dtype)

    # Both scalars in a single SMEM output (one writeback instead of two).
    scalars_ref[0, 0] = log_prior
    scalars_ref[0, 1] = log_var_post


def bayesian_linear_forward(x, weight_mu, weight_rho, eps_w,
                            bias_mu, bias_rho, eps_b):
    """BayesianLinear forward (sample=True, calculate_log_probs=True).

    Args are in PyTorch nn.Linear layout: weight_* / eps_w are (out_features, in_features),
    bias_* / eps_b are (out_features,).  Returns (y, log_prior, log_variational_posterior).
    """
    batch, in_features = x.shape
    out_features = weight_mu.shape[0]

    # Pre-transpose weight-shaped arrays to (in_features, out_features) in the wrapper:
    # the sampling / log-prob math is layout-agnostic, and this removes the w.T inside
    # the kernel (XLU transpose + relayout) so the MXU consumes w directly.
    wmu_t = weight_mu.T
    wrho_t = weight_rho.T
    weps_t = eps_w.T

    # Present bias vectors as (1, out_features) so the kernel sees 2-D refs.
    bmu2 = bias_mu.reshape(1, out_features)
    brho2 = bias_rho.reshape(1, out_features)
    beps2 = eps_b.reshape(1, out_features)

    vmem_spec = pl.BlockSpec(memory_space=pltpu.VMEM)
    smem_spec = pl.BlockSpec(memory_space=pltpu.SMEM)

    # Gridless single-block call: the whole problem fits in VMEM at these sizes.
    # TODO(synk): for scaled-up layers (large in/out_features, multiple MC samples)
    # tile out_features with a grid + scratch accumulators, generate eps in-kernel
    # via pltpu.prng_random_bits, and cast x/w to bf16 for the MXU.
    y, scalars = pl.pallas_call(
        _bayes_linear_kernel,
        out_shape=(
            jax.ShapeDtypeStruct((batch, out_features), jnp.float32),
            jax.ShapeDtypeStruct((1, 2), jnp.float32),
        ),
        in_specs=[vmem_spec] * 7,
        out_specs=(vmem_spec, smem_spec),
    )(x, wmu_t, wrho_t, weps_t, bmu2, brho2, beps2)

    return y, scalars[0, 0], scalars[0, 1]


def _reference_forward(x, weight_mu, weight_rho, eps_w, bias_mu, bias_rho, eps_b):
    """Pure-JAX reference mirroring the PyTorch module's math exactly."""
    w_sigma = jnp.log1p(jnp.exp(weight_rho))
    b_sigma = jnp.log1p(jnp.exp(bias_rho))
    w = weight_mu + w_sigma * eps_w
    b = bias_mu + b_sigma * eps_b

    def gauss_lp(val, mu, sigma):
        return jnp.sum(-LOG_SQRT_2PI - jnp.log(sigma) - (val - mu) ** 2 / (2 * sigma ** 2))

    def mix_lp(val):
        lp1 = -LOG_SQRT_2PI - math.log(SIGMA_1) - val ** 2 / (2 * SIGMA_1 ** 2)
        lp2 = -LOG_SQRT_2PI - math.log(SIGMA_2) - val ** 2 / (2 * SIGMA_2 ** 2)
        return jnp.sum(jnp.log(PI * jnp.exp(lp1) + (1 - PI) * jnp.exp(lp2)))

    log_var_post = gauss_lp(w, weight_mu, w_sigma) + gauss_lp(b, bias_mu, b_sigma)
    log_prior = mix_lp(w) + mix_lp(b)
    y = x @ w.T + b
    return y, log_prior, log_var_post


if __name__ == "__main__":
    # Small shapes consistent with BayesianLinear(in_features=16, out_features=32).
    batch, in_features, out_features = 8, 16, 32

    key = jax.random.PRNGKey(0)
    k_x, k_wmu, k_wrho, k_bmu, k_brho, k_ew, k_eb = jax.random.split(key, 7)

    x = jax.random.normal(k_x, (batch, in_features), dtype=jnp.float32)

    # Deterministic parameter init matching the PyTorch __init__ ranges.
    weight_mu = jax.random.uniform(k_wmu, (out_features, in_features),
                                   minval=-0.2, maxval=0.2, dtype=jnp.float32)
    weight_rho = jax.random.uniform(k_wrho, (out_features, in_features),
                                    minval=-5.0, maxval=-4.0, dtype=jnp.float32)
    bias_mu = jax.random.uniform(k_bmu, (out_features,),
                                 minval=-0.2, maxval=0.2, dtype=jnp.float32)
    bias_rho = jax.random.uniform(k_brho, (out_features,),
                                  minval=-5.0, maxval=-4.0, dtype=jnp.float32)

    # Standard-normal epsilon (reparameterization noise), drawn deterministically.
    eps_w = jax.random.normal(k_ew, (out_features, in_features), dtype=jnp.float32)
    eps_b = jax.random.normal(k_eb, (out_features,), dtype=jnp.float32)

    y, log_prior, log_var_post = bayesian_linear_forward(
        x, weight_mu, weight_rho, eps_w, bias_mu, bias_rho, eps_b)
    jax.block_until_ready((y, log_prior, log_var_post))

    y_ref, lp_ref, lvp_ref = _reference_forward(
        x, weight_mu, weight_rho, eps_w, bias_mu, bias_rho, eps_b)

    np.testing.assert_allclose(np.asarray(y), np.asarray(y_ref), rtol=1e-5, atol=1e-5)
    np.testing.assert_allclose(float(log_prior), float(lp_ref), rtol=1e-4, atol=1e-3)
    np.testing.assert_allclose(float(log_var_post), float(lvp_ref), rtol=1e-4, atol=1e-3)

    print("KERNEL_OK")
</pallas_src>

<mosaic_0001>
module attributes {stable_mosaic.version = 11 : i64} {
  func.func @_bayes_linear_kernel(%arg0: memref<8x16xf32, #tpu.memory_space<vmem>>, %arg1: memref<16x32xf32, #tpu.memory_space<vmem>>, %arg2: memref<16x32xf32, #tpu.memory_space<vmem>>, %arg3: memref<16x32xf32, #tpu.memory_space<vmem>>, %arg4: memref<1x32xf32, #tpu.memory_space<vmem>>, %arg5: memref<1x32xf32, #tpu.memory_space<vmem>>, %arg6: memref<1x32xf32, #tpu.memory_space<vmem>>, %arg7: memref<8x32xf32, #tpu.memory_space<vmem>>, %arg8: memref<1x2xf32, #tpu.memory_space<smem>>) attributes {dimension_semantics = [], scalar_prefetch = 0 : i64, scratch_operands = 0 : i64, tpu.core_type = #tpu.core_type<tc>} {
    %c0 = arith.constant 0 : index
    %c0_0 = arith.constant 0 : index
    %0 = vector.load %arg1[%c0, %c0_0] : memref<16x32xf32, #tpu.memory_space<vmem>>, vector<16x32xf32>
    %c0_1 = arith.constant 0 : index
    %c0_2 = arith.constant 0 : index
    %1 = vector.load %arg2[%c0_1, %c0_2] : memref<16x32xf32, #tpu.memory_space<vmem>>, vector<16x32xf32>
    %c0_3 = arith.constant 0 : index
    %c0_4 = arith.constant 0 : index
    %2 = vector.load %arg3[%c0_3, %c0_4] : memref<16x32xf32, #tpu.memory_space<vmem>>, vector<16x32xf32>
    %c0_5 = arith.constant 0 : index
    %c0_6 = arith.constant 0 : index
    %3 = vector.load %arg4[%c0_5, %c0_6] : memref<1x32xf32, #tpu.memory_space<vmem>>, vector<1x32xf32>
    %c0_7 = arith.constant 0 : index
    %c0_8 = arith.constant 0 : index
    %4 = vector.load %arg5[%c0_7, %c0_8] : memref<1x32xf32, #tpu.memory_space<vmem>>, vector<1x32xf32>
    %c0_9 = arith.constant 0 : index
    %c0_10 = arith.constant 0 : index
    %5 = vector.load %arg6[%c0_9, %c0_10] : memref<1x32xf32, #tpu.memory_space<vmem>>, vector<1x32xf32>
    %6 = math.exp %1 : vector<16x32xf32>
    %7 = math.log1p %6 : vector<16x32xf32>
    %8 = math.exp %4 : vector<1x32xf32>
    %9 = math.log1p %8 : vector<1x32xf32>
    %10 = arith.mulf %7, %2 : vector<16x32xf32>
    %11 = arith.addf %0, %10 : vector<16x32xf32>
    %12 = arith.mulf %9, %5 : vector<1x32xf32>
    %13 = arith.addf %3, %12 : vector<1x32xf32>
    %14 = math.log %7 : vector<16x32xf32>
    %cst = arith.constant -0.918938517 : f32
    %15 = vector.broadcast %cst : f32 to vector<16x32xf32>
    %16 = arith.subf %15, %14 : vector<16x32xf32>
    %cst_11 = arith.constant 5.000000e-01 : f32
    %17 = vector.broadcast %cst_11 : f32 to vector<16x32xf32>
    %18 = arith.mulf %17, %2 : vector<16x32xf32>
    %19 = arith.mulf %18, %2 : vector<16x32xf32>
    %20 = arith.subf %16, %19 : vector<16x32xf32>
    %21 = vector.shape_cast %20 : vector<16x32xf32> to vector<1x16x32xf32>
    %cst_12 = arith.constant dense<0.000000e+00> : vector<1xf32>
    %22 = vector.multi_reduction <add>, %21, %cst_12 [1, 2] : vector<1x16x32xf32> to vector<1xf32>
    %23 = vector.shape_cast %22 : vector<1xf32> to vector<1x1x1xf32>
    %24 = vector.extract %23[0, 0, 0] : f32 from vector<1x1x1xf32>
    %25 = math.log %9 : vector<1x32xf32>
    %cst_13 = arith.constant -0.918938517 : f32
    %26 = vector.broadcast %cst_13 : f32 to vector<1x32xf32>
    %27 = arith.subf %26, %25 : vector<1x32xf32>
    %cst_14 = arith.constant 5.000000e-01 : f32
    %28 = vector.broadcast %cst_14 : f32 to vector<1x32xf32>
    %29 = arith.mulf %28, %5 : vector<1x32xf32>
    %30 = arith.mulf %29, %5 : vector<1x32xf32>
    %31 = arith.subf %27, %30 : vector<1x32xf32>
    %32 = vector.shape_cast %31 : vector<1x32xf32> to vector<1x1x32xf32>
    %cst_15 = arith.constant dense<0.000000e+00> : vector<1xf32>
    %33 = vector.multi_reduction <add>, %32, %cst_15 [1, 2] : vector<1x1x32xf32> to vector<1xf32>
    %34 = vector.shape_cast %33 : vector<1xf32> to vector<1x1x1xf32>
    %35 = vector.extract %34[0, 0, 0] : f32 from vector<1x1x1xf32>
    %36 = arith.addf %24, %35 : f32
    %37 = arith.mulf %11, %11 : vector<16x32xf32>
    %cst_16 = arith.constant 5.000000e-01 : f32
    %38 = vector.broadcast %cst_16 : f32 to vector<16x32xf32>
    %39 = arith.mulf %37, %38 : vector<16x32xf32>
    %cst_17 = arith.constant -0.918938517 : f32
    %40 = vector.broadcast %cst_17 : f32 to vector<16x32xf32>
    %41 = arith.subf %40, %39 : vector<16x32xf32>
    %cst_18 = arith.constant 81377.3984 : f32
    %42 = vector.broadcast %cst_18 : f32 to vector<16x32xf32>
    %43 = arith.mulf %37, %42 : vector<16x32xf32>
    %cst_19 = arith.constant 5.08106136 : f32
    %44 = vector.broadcast %cst_19 : f32 to vector<16x32xf32>
    %45 = arith.subf %44, %43 : vector<16x32xf32>
    %46 = arith.subf %45, %41 : vector<16x32xf32>
    %47 = math.exp %46 : vector<16x32xf32>
    %cst_20 = arith.constant 5.000000e-01 : f32
    %48 = vector.broadcast %cst_20 : f32 to vector<16x32xf32>
    %49 = arith.mulf %48, %47 : vector<16x32xf32>
    %cst_21 = arith.constant 5.000000e-01 : f32
    %50 = vector.broadcast %cst_21 : f32 to vector<16x32xf32>
    %51 = arith.addf %50, %49 : vector<16x32xf32>
    %52 = math.log %51 : vector<16x32xf32>
    %53 = arith.addf %41, %52 : vector<16x32xf32>
    %54 = vector.shape_cast %53 : vector<16x32xf32> to vector<1x16x32xf32>
    %cst_22 = arith.constant dense<0.000000e+00> : vector<1xf32>
    %55 = vector.multi_reduction <add>, %54, %cst_22 [1, 2] : vector<1x16x32xf32> to vector<1xf32>
    %56 = vector.shape_cast %55 : vector<1xf32> to vector<1x1x1xf32>
    %57 = vector.extract %56[0, 0, 0] : f32 from vector<1x1x1xf32>
    %58 = arith.mulf %13, %13 : vector<1x32xf32>
    %cst_23 = arith.constant 5.000000e-01 : f32
    %59 = vector.broadcast %cst_23 : f32 to vector<1x32xf32>
    %60 = arith.mulf %58, %59 : vector<1x32xf32>
    %cst_24 = arith.constant -0.918938517 : f32
    %61 = vector.broadcast %cst_24 : f32 to vector<1x32xf32>
    %62 = arith.subf %61, %60 : vector<1x32xf32>
    %cst_25 = arith.constant 81377.3984 : f32
    %63 = vector.broadcast %cst_25 : f32 to vector<1x32xf32>
    %64 = arith.mulf %58, %63 : vector<1x32xf32>
    %cst_26 = arith.constant 5.08106136 : f32
    %65 = vector.broadcast %cst_26 : f32 to vector<1x32xf32>
    %66 = arith.subf %65, %64 : vector<1x32xf32>
    %67 = arith.subf %66, %62 : vector<1x32xf32>
    %68 = math.exp %67 : vector<1x32xf32>
    %cst_27 = arith.constant 5.000000e-01 : f32
    %69 = vector.broadcast %cst_27 : f32 to vector<1x32xf32>
    %70 = arith.mulf %69, %68 : vector<1x32xf32>
    %cst_28 = arith.constant 5.000000e-01 : f32
    %71 = vector.broadcast %cst_28 : f32 to vector<1x32xf32>
    %72 = arith.addf %71, %70 : vector<1x32xf32>
    %73 = math.log %72 : vector<1x32xf32>
    %74 = arith.addf %62, %73 : vector<1x32xf32>
    %75 = vector.shape_cast %74 : vector<1x32xf32> to vector<1x1x32xf32>
    %cst_29 = arith.constant dense<0.000000e+00> : vector<1xf32>
    %76 = vector.multi_reduction <add>, %75, %cst_29 [1, 2] : vector<1x1x32xf32> to vector<1xf32>
    %77 = vector.shape_cast %76 : vector<1xf32> to vector<1x1x1xf32>
    %78 = vector.extract %77[0, 0, 0] : f32 from vector<1x1x1xf32>
    %79 = arith.addf %57, %78 : f32
    %c0_30 = arith.constant 0 : index
    %c0_31 = arith.constant 0 : index
    %80 = vector.load %arg0[%c0_30, %c0_31] : memref<8x16xf32, #tpu.memory_space<vmem>>, vector<8x16xf32>
    %cst_32 = arith.constant dense<0.000000e+00> : vector<8x32xf32>
    %81 = tpu.matmul %80, %11, %cst_32 {dimension_numbers = #tpu.dot_dimension_numbers<[1], [0], [0], [1], [0, 0, 1, 1], [], []>} : vector<8x16xf32>, vector<16x32xf32>, vector<8x32xf32> -> vector<8x32xf32>
    %82 = vector.broadcast %13 : vector<1x32xf32> to vector<8x32xf32>
    %83 = arith.addf %81, %82 : vector<8x32xf32>
    %c0_33 = arith.constant 0 : index
    %c0_34 = arith.constant 0 : index
    %84 = vector.load %arg7[%c0_33, %c0_34] : memref<8x32xf32, #tpu.memory_space<vmem>>, vector<8x32xf32>
    tpu.vector_store %arg7[%c0_33, %c0_34], %83 {strides = array<i32>} : memref<8x32xf32, #tpu.memory_space<vmem>>, vector<8x32xf32>,
    %c0_35 = arith.constant 0 : index
    %c0_36 = arith.constant 0 : index
    %85 = memref.load %arg8[%c0_35, %c0_36] : memref<1x2xf32, #tpu.memory_space<smem>>
    memref.store %79, %arg8[%c0_35, %c0_36] : memref<1x2xf32, #tpu.memory_space<smem>>
    %c0_37 = arith.constant 0 : index
    %c1 = arith.constant 1 : index
    %86 = memref.load %arg8[%c0_37, %c1] : memref<1x2xf32, #tpu.memory_space<smem>>
    memref.store %36, %arg8[%c0_37, %c1] : memref<1x2xf32, #tpu.memory_space<smem>>
    return
  }
}

</mosaic_0001>

<llo_original>
// kernel: tpu_custom_call.1
$region0: #{tpu_custom_call.1}
  #allocation0 [shape = 'u32[]', space=smem, size = 0x4, offset = 0x4, fixed_abs, tag = 'smem constant byte address 0x4 - core index']
  #allocation1 [shape = 'u32[144,128]{1,0:T(1,128)}', space=vmem, size = 0x12000, scoped, tag = 'internal scratch']
  %s0 = inlined_call_operand.hbm [shape: f32[8,16], index: 0, kind: input, shape index: {}]
  %s1 = inlined_call_operand.hbm [shape: f32[16,32], index: 1, kind: input, shape index: {}]
  %s2 = inlined_call_operand.hbm [shape: f32[16,32], index: 2, kind: input, shape index: {}]
  %s3 = inlined_call_operand.hbm [shape: f32[16,32], index: 3, kind: input, shape index: {}]
  %s4 = inlined_call_operand.vmem [shape: f32[1,32], index: 4, kind: input, shape index: {}]
  %s5 = inlined_call_operand.vmem [shape: f32[1,32], index: 5, kind: input, shape index: {}]
  %s6 = inlined_call_operand.vmem [shape: f32[1,32], index: 6, kind: input, shape index: {}]
  %s7 = inlined_call_operand.hbm [shape: f32[8,32], index: 7, kind: output, shape index: {0}]
  %s8 = inlined_call_operand.hbm [shape: f32[1,2], index: 8, kind: output, shape index: {1}]
  %9 = xla_tuple %s7, %s8
  %s10 = sld [smem:[#allocation0]]
  $region62: #{tpu_custom_call.1} parent=0
    _
  %s12 = ssub.s32 1, %s10
  %s13 = scalar_select 0, %s12, %s10
  $region1: #{tpu_custom_call.1} parent=0
    #allocation2 [shape = 'u8[4096]{0}', space=vmem, size = 0x1000, scoped, tag = 'input window, operand 0, single buffered']
    #allocation3 [shape = 's32[1]{0}', space=sflag, size = 0x4, scoped, tag = 'scoped memory for tpu_custom_call.1']
    #allocation4 [shape = 's32[1]{0}', space=sflag, size = 0x4, scoped, tag = 'scoped memory for tpu_custom_call.1']
    #allocation5 [shape = 's32[1]{0}', space=sflag, size = 0x4, scoped, tag = 'scoped memory for tpu_custom_call.1']
    #allocation6 [shape = 'u8[8192]{0}', space=vmem, size = 0x2000, scoped, tag = 'input window, operand 1, single buffered']
    #allocation7 [shape = 's32[1]{0}', space=sflag, size = 0x4, scoped, tag = 'scoped memory for tpu_custom_call.1']
    #allocation8 [shape = 'u8[8192]{0}', space=vmem, size = 0x2000, scoped, tag = 'input window, operand 2, single buffered']
    #allocation9 [shape = 'u8[8192]{0}', space=vmem, size = 0x2000, scoped, tag = 'input window, operand 3, single buffered']
    #allocation10 [shape = 's32[1]{0}', space=sflag, size = 0x4, scoped, tag = 'scoped memory for tpu_custom_call.1']
    #allocation11 [shape = 'u8[4096]{0}', space=vmem, size = 0x1000, scoped, tag = 'output window, operand 0, single buffered']
    #allocation12 [shape = 'u8[512]{0}', space=smem, size = 0x200, scoped, tag = 'output window, operand 1, single buffered']
    %14 = vsyncpa [#allocation3], 0
    %15 = vsyncpa [#allocation7], 0
    %16 = vsyncpa [#allocation10], 0
    %17 = vsyncpa [#allocation4], 0
    %18 = vsyncpa [#allocation5], 0
    // Predicated region
    $region2: #{tpu_custom_call.1} parent=1 // pred_check
      _
    $region3: #{tpu_custom_call.1} parent=1 // pred_check_branch
      %20 = sbr.rel (0) target = $region5
    $region4: #{tpu_custom_call.1} parent=1 // pred_region
      %s22 = ssub.s32 128, 128
      %23 = vsyncadd [#allocation3], %s22
      %s25 = sshll.u32 [#allocation2], 4
      %s26 = int_to_ptr.vmem [resolvable:$true] %s25
      %28 = dma.hbm_to_vmem [thread:$0]  %s0, 128, %s26, [#allocation3]
    $region5: #{tpu_custom_call.1} parent=1 // pred_fallthru
      _
    // Predicated region
    $region6: #{tpu_custom_call.1} parent=1 // pred_check
      _
    $region7: #{tpu_custom_call.1} parent=1 // pred_check_branch
      %30 = sbr.rel (0) target = $region9
    $region8: #{tpu_custom_call.1} parent=1 // pred_region
      %s32 = ssub.s32 256, 256
      %33 = vsyncadd [#allocation7], %s32
      %s34 = sshll.u32 [#allocation6], 4
      %s35 = int_to_ptr.vmem [resolvable:$true] %s34
      %40 = dma.hbm_to_vmem [thread:$0]  %s1, 256, %s35, [#allocation7], 128, 128, 8
    $region9: #{tpu_custom_call.1} parent=1 // pred_fallthru
      _
    // Predicated region
    $region10: #{tpu_custom_call.1} parent=1 // pred_check
      _
    $region11: #{tpu_custom_call.1} parent=1 // pred_check_branch
      %42 = sbr.rel (0) target = $region13
    $region12: #{tpu_custom_call.1} parent=1 // pred_region
      %s44 = ssub.s32 256, 256
      %45 = vsyncadd [#allocation7], %s44
      %s46 = sshll.u32 [#allocation8], 4
      %s47 = int_to_ptr.vmem [resolvable:$true] %s46
      %52 = dma.hbm_to_vmem [thread:$0]  %s2, 256, %s47, [#allocation7], 128, 128, 8
    $region13: #{tpu_custom_call.1} parent=1 // pred_fallthru
      _
    // Predicated region
    $region14: #{tpu_custom_call.1} parent=1 // pred_check
      _
    $region15: #{tpu_custom_call.1} parent=1 // pred_check_branch
      %54 = sbr.rel (0) target = $region17
    $region16: #{tpu_custom_call.1} parent=1 // pred_region
      %s56 = ssub.s32 256, 256
      %57 = vsyncadd [#allocation10], %s56
      %s58 = sshll.u32 [#allocation9], 4
      %s59 = int_to_ptr.vmem [resolvable:$true] %s58
      %64 = dma.hbm_to_vmem [thread:$0]  %s3, 256, %s59, [#allocation10], 128, 128, 8
    $region17: #{tpu_custom_call.1} parent=1 // pred_fallthru
      _
    // Predicated region
    $region18: #{tpu_custom_call.1} parent=1 // pred_check
      _
    $region19: #{tpu_custom_call.1} parent=1 // pred_check_branch
      %66 = sbr.rel (0) target = $region21
    $region20: #{tpu_custom_call.1} parent=1 // pred_region
      _
    $region21: #{tpu_custom_call.1} parent=1 // pred_fallthru
      _
    // Predicated region
    $region22: #{tpu_custom_call.1} parent=1 // pred_check
      _
    $region23: #{tpu_custom_call.1} parent=1 // pred_check_branch
      %68 = sbr.rel (0) target = $region25
    $region24: #{tpu_custom_call.1} parent=1 // pred_region
      _
    $region25: #{tpu_custom_call.1} parent=1 // pred_fallthru
      _
    // Predicated region
    $region26: #{tpu_custom_call.1} parent=1 // pred_check
      _
    $region27: #{tpu_custom_call.1} parent=1 // pred_check_branch
      %70 = sbr.rel (0) target = $region29
    $region28: #{tpu_custom_call.1} parent=1 // pred_region
      _
    $region29: #{tpu_custom_call.1} parent=1 // pred_fallthru
      _
    // Predicated region
    $region30: #{tpu_custom_call.1} parent=1 // pred_check
      _
    $region31: #{tpu_custom_call.1} parent=1 // pred_check_branch
      %72 = sbr.rel (0) target = $region33
    $region32: #{tpu_custom_call.1} parent=1 // pred_region
      %73 = dma.done [#allocation3], 128
    $region33: #{tpu_custom_call.1} parent=1 // pred_fallthru
      _
    // Predicated region
    $region34: #{tpu_custom_call.1} parent=1 // pred_check
      _
    $region35: #{tpu_custom_call.1} parent=1 // pred_check_branch
      %75 = sbr.rel (0) target = $region37
    $region36: #{tpu_custom_call.1} parent=1 // pred_region
      %76 = dma.done [#allocation7], 256
    $region37: #{tpu_custom_call.1} parent=1 // pred_fallthru
      _
    // Predicated region
    $region38: #{tpu_custom_call.1} parent=1 // pred_check
      _
    $region39: #{tpu_custom_call.1} parent=1 // pred_check_branch
      %78 = sbr.rel (0) target = $region41
    $region40: #{tpu_custom_call.1} parent=1 // pred_region
      %79 = dma.done [#allocation7], 256
    $region41: #{tpu_custom_call.1} parent=1 // pred_fallthru
      _
    // Predicated region
    $region42: #{tpu_custom_call.1} parent=1 // pred_check
      _
    $region43: #{tpu_custom_call.1} parent=1 // pred_check_branch
      %81 = sbr.rel (0) target = $region45
    $region44: #{tpu_custom_call.1} parent=1 // pred_region
      %82 = dma.done [#allocation10], 256
    $region45: #{tpu_custom_call.1} parent=1 // pred_fallthru
      _
    %v83 = vld [vmem:[#allocation6] sm:$0xff]
    %v84 = vld [vmem:[#allocation6 + $0x8] sm:$0xff]
    %v85 = vld [vmem:[#allocation8] sm:$0xff]
    %v86 = vld [vmem:[#allocation8 + $0x8] sm:$0xff]
    %v87 = vld [vmem:[#allocation9] sm:$0xff]
    %v88 = vld [vmem:[#allocation9 + $0x8] sm:$0xff]
    %v89 = vld [vmem:[%s4] sm:$0x1]
    %v90 = vld [vmem:[%s5] sm:$0x1]
    %v91 = vld [vmem:[%s6] sm:$0x1]
    %v92 = vmul.f32 %v85, 1.442695
    %v93 = vpow.pop %v92
    %v94 = vmul.f32 %v86, 1.442695
    %v95 = vpow.pop %v94
    %v96 = vadd.f32 %v93, 1.0
    %v97 = vlog2.pop %v96
    %v98 = vmul.f32 %v97, 0.6931472
    %v99 = vmul.f32 -0.5, %v93
    %v100 = vadd.f32 %v99, 1.0
    %v101 = vmul.f32 %v100, %v93
    %v102 = vand.u32 2147483647, %v93
    %vm103 = vcmp.lt.f32.partialorder %v102, 0.0004427343
    %v104 = vsel %vm103, %v101, %v98
    %v105 = vadd.f32 %v95, 1.0
    %v106 = vlog2.pop %v105
    %v107 = vmul.f32 %v106, 0.6931472
    %v108 = vmul.f32 -0.5, %v95
    %v109 = vadd.f32 %v108, 1.0
    %v110 = vmul.f32 %v109, %v95
    %v111 = vand.u32 2147483647, %v95
    %vm112 = vcmp.lt.f32.partialorder %v111, 0.0004427343
    %v113 = vsel %vm112, %v110, %v107
    %v114 = vmul.f32 %v90, 1.442695
    %v115 = vpow.pop %v114
    %v116 = vadd.f32 %v115, 1.0
    %v117 = vlog2.pop %v116
    %v118 = vmul.f32 %v117, 0.6931472
    %v119 = vmul.f32 -0.5, %v115
    %v120 = vadd.f32 %v119, 1.0
    %v121 = vmul.f32 %v120, %v115
    %v122 = vand.u32 2147483647, %v115
    %vm123 = vcmp.lt.f32.partialorder %v122, 0.0004427343
    %v124 = vsel %vm123, %v121, %v118
    %v125 = vmul.f32 %v104, %v87
    %v126 = vmul.f32 %v113, %v88
    %v127 = vadd.f32 %v83, %v125
    %v128 = vadd.f32 %v84, %v126
    %v129 = vmul.f32 %v124, %v91
    %v130 = vadd.f32 %v89, %v129
    %v131 = vlog2.pop %v104
    %v132 = vmul.f32 %v131, 0.6931472
    %v133 = vlog2.pop %v113
    %v134 = vmul.f32 %v133, 0.6931472
    %v135 = vsub.f32 -0.9189385, %v132
    %v136 = vsub.f32 -0.9189385, %v134
    %v137 = vmul.f32 %v87, 0.5
    %v138 = vmul.f32 %v88, 0.5
    %v139 = vmul.f32 %v137, %v87
    %v140 = vmul.f32 %v138, %v88
    %v141 = vsub.f32 %v135, %v139
    %v142 = vsub.f32 %v136, %v140
    %vm143 = vcmask 261120
    %v144 = vsel %vm143, %v141, 0.0
    %v145 = vsel %vm143, %v142, 0.0
    %v146 = vadd.f32 %v144, %v145
    %147 = vadd.xlane.f32.xlu0 %v146
    %v148 = vpop.xlane.xlu0 %147
    %v149 = vrot.slane %v148, 4
    %v150 = vadd.f32 %v148, %v149
    %v151 = vrot.slane %v150, 2
    %v152 = vadd.f32 %v150, %v151
    %v153 = vrot.slane %v152, 1
    %v154 = vadd.f32 %v152, %v153
    %s155 = vtos %v154
    %v156 = vlog2.pop %v124
    %v157 = vmul.f32 %v156, 0.6931472
    %v158 = vsub.f32 -0.9189385, %v157
    %v159 = vmul.f32 %v91, 0.5
    %v160 = vmul.f32 %v159, %v91
    %v161 = vsub.f32 %v158, %v160
    %vm162 = vcmask 253952
    %v163 = vsel %vm162, %v161, 0.0
    %164 = vadd.xlane.f32.xlu0 %v163
    %v165 = vpop.xlane.xlu0 %164
    %v166 = vrot.slane %v165, 4
    %v167 = vadd.f32 %v165, %v166
    %v168 = vrot.slane %v167, 2
    %v169 = vadd.f32 %v167, %v168
    %v170 = vrot.slane %v169, 1
    %v171 = vadd.f32 %v169, %v170
    %s172 = vtos %v171
    %s173 = sadd.f32 %s155, %s172
    %v174 = vmul.f32 %v127, %v127
    %v175 = vmul.f32 %v128, %v128
    %v176 = vmul.f32 %v174, 0.5
    %v177 = vmul.f32 %v175, 0.5
    %v178 = vsub.f32 -0.9189385, %v176
    %v179 = vsub.f32 -0.9189385, %v177
    %v180 = vmul.f32 %v174, 81377.4
    %v181 = vmul.f32 %v175, 81377.4
    %v182 = vsub.f32 5.0810614, %v180
    %v183 = vsub.f32 5.0810614, %v181
    %v184 = vsub.f32 %v182, %v178
    %v185 = vsub.f32 %v183, %v179
    %v186 = vmul.f32 %v184, 1.442695
    %v187 = vpow.pop %v186
    %v188 = vmul.f32 %v185, 1.442695
    %v189 = vpow.pop %v188
    %v190 = vmul.f32 %v187, 0.5
    %v191 = vmul.f32 %v189, 0.5
    %v192 = vadd.f32 %v190, 0.5
    %v193 = vadd.f32 %v191, 0.5
    %v194 = vlog2.pop %v192
    %v195 = vmul.f32 %v194, 0.6931472
    %v196 = vlog2.pop %v193
    %v197 = vmul.f32 %v196, 0.6931472
    %v198 = vadd.f32 %v178, %v195
    %v199 = vadd.f32 %v179, %v197
    %v200 = vsel %vm143, %v198, 0.0
    %v201 = vsel %vm143, %v199, 0.0
    %v202 = vadd.f32 %v200, %v201
    %203 = vadd.xlane.f32.xlu0 %v202
    %v204 = vpop.xlane.xlu0 %203
    %v205 = vrot.slane %v204, 4
    %v206 = vadd.f32 %v204, %v205
    %v207 = vrot.slane %v206, 2
    %v208 = vadd.f32 %v206, %v207
    %v209 = vrot.slane %v208, 1
    %v210 = vadd.f32 %v208, %v209
    %s211 = vtos %v210
    %v212 = vmul.f32 %v130, %v130
    %v213 = vmul.f32 %v212, 0.5
    %v214 = vsub.f32 -0.9189385, %v213
    %v215 = vmul.f32 %v212, 81377.4
    %v216 = vsub.f32 5.0810614, %v215
    %v217 = vsub.f32 %v216, %v214
    %v218 = vmul.f32 %v217, 1.442695
    %v219 = vpow.pop %v218
    %v220 = vmul.f32 %v219, 0.5
    %v221 = vadd.f32 %v220, 0.5
    %v222 = vlog2.pop %v221
    %v223 = vmul.f32 %v222, 0.6931472
    %v224 = vadd.f32 %v214, %v223
    %v225 = vsel %vm162, %v224, 0.0
    %226 = vadd.xlane.f32.xlu0 %v225
    %v227 = vpop.xlane.xlu0 %226
    %v228 = vrot.slane %v227, 4
    %v229 = vadd.f32 %v227, %v228
    %v230 = vrot.slane %v229, 2
    %v231 = vadd.f32 %v229, %v230
    %v232 = vrot.slane %v231, 1
    %v233 = vadd.f32 %v231, %v232
    %s234 = vtos %v233
    %s235 = sadd.f32 %s211, %s234
    %v236 = vld [vmem:[#allocation2] sm:$0xff]
    %v238 = vlaneseq
    %v239 = vshrl.u32 %v238, 7
    %v240 = vsub.s32 0, %v239
    %v241 = vrot.slane %v130, %v240
    %vm243 = vcmask 130048
    %v245 = vsel %vm243, %v236, 0
    %247 = vmatprep.subr.mxu0 0.0
    %248 = vmatpush1.msra.mxu0 %v127
    %249 = vmatprep.subr.mxu0 0.0
    %250 = vmatpush1.msra.mxu0 %v128
    %251 = vmatprep.subr.mxu0 0.0
    %252 = vmatpush1.msra.mxu0 0.0
    %253 = vmatprep.subr.mxu0 0.0
    %254 = vmatpush1.msra.mxu0 0.0
    %255 = vmatprep.subr.mxu0 0.0
    %256 = vmatpush1.msra.mxu0 0.0
    %257 = vmatprep.subr.mxu0 0.0
    %258 = vmatpush1.msra.mxu0 0.0
    %259 = vmatprep.subr.mxu0 0.0
    %260 = vmatpush1.msra.mxu0 0.0
    %261 = vmatprep.subr.mxu0 0.0
    %262 = vmatpush1.msra.mxu0 0.0
    %263 = vmatprep.subr.mxu0 0.0
    %264 = vmatpush1.msra.mxu0 0.0
    %265 = vmatprep.subr.mxu0 0.0
    %266 = vmatpush1.msra.mxu0 0.0
    %267 = vmatprep.subr.mxu0 0.0
    %268 = vmatpush1.msra.mxu0 0.0
    %269 = vmatprep.subr.mxu0 0.0
    %270 = vmatpush1.msra.mxu0 0.0
    %271 = vmatprep.subr.mxu0 0.0
    %272 = vmatpush1.msra.mxu0 0.0
    %273 = vmatprep.subr.mxu0 0.0
    %274 = vmatpush1.msra.mxu0 0.0
    %275 = vmatprep.subr.mxu0 0.0
    %276 = vmatpush1.msra.mxu0 0.0
    %277 = vmatprep.subr.mxu0 0.0
    %278 = vmatpush1.msra.mxu0 0.0
    %279 = vmatprep.subr.mxu0 0.0
    %280 = vmatpush1.msra.mxu0 0.0
    %281 = vmatprep.subr.mxu0 0.0
    %282 = vmatpush1.msra.mxu0 0.0
    %283 = vmatprep.subr.mxu0 0.0
    %284 = vmatpush1.msra.mxu0 0.0
    %285 = vmatprep.subr.mxu0 0.0
    %286 = vmatpush1.msra.mxu0 0.0
    %287 = vmatprep.subr.mxu0 0.0
    %288 = vmatpush1.msra.mxu0 0.0
    %289 = vmatprep.subr.mxu0 0.0
    %290 = vmatpush1.msra.mxu0 0.0
    %291 = vmatprep.subr.mxu0 0.0
    %292 = vmatpush1.msra.mxu0 0.0
    %293 = vmatprep.subr.mxu0 0.0
    %294 = vmatpush1.msra.mxu0 0.0
    %295 = vmatprep.subr.mxu0 0.0
    %296 = vmatpush1.msra.mxu0 0.0
    %297 = vmatprep.subr.mxu0 0.0
    %298 = vmatpush1.msra.mxu0 0.0
    %299 = vmatprep.subr.mxu0 0.0
    %300 = vmatpush1.msra.mxu0 0.0
    %301 = vmatprep.subr.mxu0 0.0
    %302 = vmatpush1.msra.mxu0 0.0
    %303 = vmatprep.subr.mxu0 0.0
    %304 = vmatpush1.msra.mxu0 0.0
    %305 = vmatprep.subr.mxu0 0.0
    %306 = vmatpush1.msra.mxu0 0.0
    %307 = vmatprep.subr.mxu0 0.0
    %308 = vmatpush1.msra.mxu0 0.0
    %309 = vmatprep.subr.mxu0 0.0
    %310 = vmatpush1.msra.mxu0 0.0
    %311 = vmatprep.mubr.f32.mxu0 0.0
    %312 = vmatmul.mubr.f32.gmra.mrb[0].mxu0 %v245
    %v313 = vpop.f32.mrb[0].mxu0
    %v314 = vadd.f32 %v241, %v313
    %v315 = vpop.f32.mrb[0].mxu0
    %316 = vdwg.mxu0
    %317 = vst.msk [vmem:[#allocation11] sm:$0xff] %vm143, %v314
    %s318 = scalar_lea.smem [#allocation12], 0
    %319 = sst [smem:[%s318]] %s235
    %s320 = scalar_lea.smem [#allocation12], 1
    %321 = sst [smem:[%s320]] %s173
    // Predicated region
    $region46: #{tpu_custom_call.1} parent=1 // pred_check
      _
    $region47: #{tpu_custom_call.1} parent=1 // pred_check_branch
      %323 = sbr.rel (0) target = $region49
    $region48: #{tpu_custom_call.1} parent=1 // pred_region
      %s325 = ssub.s32 128, 128
      %326 = vsyncadd [#allocation4], %s325
      %s328 = sshll.u32 [#allocation11], 4
      %s329 = int_to_ptr.vmem [resolvable:$true] %s328
      %331 = dma.vmem_to_hbm [thread:$0]  %s329, 128, %s7, [#allocation4]
    $region49: #{tpu_custom_call.1} parent=1 // pred_fallthru
      _
    // Predicated region
    $region50: #{tpu_custom_call.1} parent=1 // pred_check
      _
    $region51: #{tpu_custom_call.1} parent=1 // pred_check_branch
      %333 = sbr.rel (0) target = $region53
    $region52: #{tpu_custom_call.1} parent=1 // pred_region
      %s335 = ssub.s32 16, 16
      %336 = vsyncadd [#allocation5], %s335
      %339 = dma.smem_to_hbm [#allocation12], 16, %s8, [#allocation5]
    $region53: #{tpu_custom_call.1} parent=1 // pred_fallthru
      _
    // Predicated region
    $region54: #{tpu_custom_call.1} parent=1 // pred_check
      _
    $region55: #{tpu_custom_call.1} parent=1 // pred_check_branch
      %341 = sbr.rel (0) target = $region57
    $region56: #{tpu_custom_call.1} parent=1 // pred_region
      %342 = dma.done [#allocation4], 128
    $region57: #{tpu_custom_call.1} parent=1 // pred_fallthru
      _
    // Predicated region
    $region58: #{tpu_custom_call.1} parent=1 // pred_check
      _
    $region59: #{tpu_custom_call.1} parent=1 // pred_check_branch
      %344 = sbr.rel (0) target = $region61
    $region60: #{tpu_custom_call.1} parent=1 // pred_region
      %345 = dma.done [#allocation5], 16
    $region61: #{tpu_custom_call.1} parent=1 // pred_fallthru
      _
    %346 = sfence
    %347 = vsyncpa [#allocation3], 1
    %348 = vsyncpa [#allocation7], 1
    %349 = vsyncpa [#allocation10], 1
    %350 = vsyncpa [#allocation4], 1
    %351 = vsyncpa [#allocation5], 1

</llo_original>
